<compile_context>
chip_gen: v5e
topology: v5e:2x2
jax: 0.10.0
libtpu: 0.0.40
codegen_flags: <defaults>
</compile_context>

<pallas_src>
from functools import partial

import jax
import jax.numpy as jnp
from jax import lax
from jax.experimental import pallas as pl
from jax.experimental.pallas import tpu as pltpu

LANE = 128
SUBLANE = 8


def _round_up(n, m):
    return ((n + m - 1) // m) * m


def _sigmoid(x):
    # == jax.nn.sigmoid, expressed with tanh so it maps to the EUP slot and
    # avoids the multi-op VALU divide / inf intermediates of 1/(1+exp(-x)).
    return 0.5 * jnp.tanh(0.5 * x) + 0.5


def lstm_net_kernel(x_ref, h0_ref, c0_ref, wih_ref, whh_ref, b_ref,
                    fcw_ref, fcb_ref,
                    out_ref, hn_ref, cn_ref, xw_ref):
    # x:(T*Bp, D)      h0/c0:(Bp, GP)   wih:(D, 4*GP)   whh:(GP, 4*GP)
    # b:(1, 4*GP)      fcw:(GP, Op)     fcb:(1, Op)
    # out:(Bp, Op)     hn/cn:(Bp, GP)   xw scratch:(T*Bp, 4*GP)
    Bp, GP = h0_ref.shape
    T = x_ref.shape[0] // Bp

    # ---- hoisted, time-parallel input projection (bias folded in) ----------
    xw_ref[...] = (jnp.dot(x_ref[...], wih_ref[...],
                           preferred_element_type=jnp.float32)
                   + b_ref[...])

    # ---- serial recurrence: only h @ Whh, (Bp,GP)@(GP,4GP), per step --------
    # Explicit weight-stationary MXU driving (matmul_push_rhs/acc_lhs/pop)
    # would also remove the per-step RHS push; with the packed (32,128) whh
    # that push is already tiny, so the portable jnp.dot form is kept.
    def step(t, carry):
        h, c = carry
        row = pl.multiple_of(t * Bp, Bp)                  # sublane-aligned
        gates = (xw_ref[pl.ds(row, Bp), :]
                 + jnp.dot(h, whh_ref[...],
                           preferred_element_type=jnp.float32))
        sg = _sigmoid(gates)     # one EUP push over the whole packed block
        th = jnp.tanh(gates)     # one EUP push
        i_g = sg[:, 0 * GP:1 * GP]
        f_g = sg[:, 1 * GP:2 * GP]
        g_g = th[:, 2 * GP:3 * GP]
        o_g = sg[:, 3 * GP:4 * GP]
        c_new = f_g * c + i_g * g_g
        h_new = o_g * jnp.tanh(c_new)
        return (h_new, c_new)

    # Unroll only to save loop overhead at small T; the recurrence is serial
    # in h, so no cross-step MXU/EUP overlap is expected from unrolling.
    h, c = lax.fori_loop(0, T, step, (h0_ref[...], c0_ref[...]),
                         unroll=bool(T <= 16))

    hn_ref[...] = h
    cn_ref[...] = c
    out_ref[...] = (jnp.dot(h, fcw_ref[...],
                            preferred_element_type=jnp.float32)
                    + fcb_ref[...])


def prepare_params(params):
    """One-time layout work (hoisted out of the steady-state forward).

    Packs all four PyTorch gate blocks (order i, f, g, o) into a single
    lane-dense gate axis of width 4*GP, where GP = 32 when 4*H <= 128
    (packed layout) and GP = round_up(H, 128) otherwise.  Padded rows/cols
    are zero so padded hidden lanes stay exactly zero through the recurrence.
    """
    H = params["weight_hh"].shape[1]
    D = params["weight_ih"].shape[1]
    O = params["fc_w"].shape[0]
    GP = (LANE // 4) if (4 * H <= LANE) else _round_up(H, LANE)
    GW = 4 * GP
    Op = _round_up(O, LANE)
    f32 = jnp.float32

    wih = jnp.zeros((D, GW), f32)
    whh = jnp.zeros((GP, GW), f32)
    b = jnp.zeros((1, GW), f32)
    bias = (params["bias_ih"] + params["bias_hh"]).astype(f32)
    for k in range(4):
        wih = wih.at[:, k * GP:k * GP + H].set(
            params["weight_ih"][k * H:(k + 1) * H, :].T.astype(f32))
        whh = whh.at[:H, k * GP:k * GP + H].set(
            params["weight_hh"][k * H:(k + 1) * H, :].T.astype(f32))
        b = b.at[0, k * GP:k * GP + H].set(bias[k * H:(k + 1) * H])

    fcw = jnp.zeros((GP, Op), f32).at[:H, :O].set(params["fc_w"].T.astype(f32))
    fcb = jnp.zeros((1, Op), f32).at[0, :O].set(params["fc_b"].astype(f32))

    return {"wih": wih, "whh": whh, "b": b, "fcw": fcw, "fcb": fcb,
            "H": int(H), "O": int(O)}


@partial(jax.jit, static_argnames=("H", "O"))
def lstm_net_forward(x, h0, c0, wih, whh, b, fcw, fcb, *, H, O):
    """x:(B,T,D) batch_first; h0,c0:(1,B,H). Returns (out:(B,O), (hn, cn))."""
    B, T, D = x.shape
    Bp = _round_up(B, SUBLANE)       # sublane height
    GP = whh.shape[0]                # gate pitch == padded state width
    GW = whh.shape[1]                # 4 * GP
    Op = fcw.shape[1]                # lane-dense output width
    f32 = jnp.float32

    # time-major, batch zero-padded, flattened to (T*Bp, D).  D is left
    # unpadded (Mosaic masks the sub-128 K remainder in the matmul).
    x_tm = jnp.transpose(x, (1, 0, 2)).astype(f32)                 # (T,B,D)
    x_p = jnp.zeros((T, Bp, D), f32).at[:, :B, :].set(x_tm)
    x2d = x_p.reshape(T * Bp, D)

    h0_p = jnp.zeros((Bp, GP), f32).at[:B, :H].set(h0[0].astype(f32))
    c0_p = jnp.zeros((Bp, GP), f32).at[:B, :H].set(c0[0].astype(f32))

    # Advisory cost estimate in REAL (unpadded) dims.
    flops = (2 * T * B * D * 4 * H          # hoisted input projection
             + 2 * T * B * H * 4 * H        # serial recurrent matmuls
             + 2 * B * H * O)               # final FC
    transcendentals = T * B * 5 * H         # 3 sigmoid + 2 tanh per step
    bytes_accessed = 4 * (x2d.size + wih.size + whh.size + b.size
                          + fcw.size + fcb.size
                          + 2 * Bp * GP                       # h0, c0
                          + Bp * Op + 2 * Bp * GP)            # outputs

    vmem = pl.BlockSpec(memory_space=pltpu.MemorySpace.VMEM)
    out_p, hn_p, cn_p = pl.pallas_call(
        lstm_net_kernel,
        out_shape=(
            jax.ShapeDtypeStruct((Bp, Op), f32),
            jax.ShapeDtypeStruct((Bp, GP), f32),
            jax.ShapeDtypeStruct((Bp, GP), f32),
        ),
        in_specs=[vmem] * 8,
        out_specs=(vmem, vmem, vmem),
        scratch_shapes=[pltpu.VMEM((T * Bp, GW), f32)],
        # Actual VMEM use here is < 0.1 MiB; this limit is a harmless cap.
        # When scaling up, move to a T-chunked grid and size this per
        # generation (~48-56 MiB on v7x, up to ~100 MiB on v5e/v6e).
        compiler_params=pltpu.CompilerParams(
            vmem_limit_bytes=16 * 1024 * 1024),
        cost_estimate=pl.CostEstimate(
            flops=flops,
            transcendentals=transcendentals,
            bytes_accessed=bytes_accessed),
    )(x2d, h0_p, c0_p, wih, whh, b, fcw, fcb)

    out = out_p[:B, :O]
    hn = hn_p[:B, :H][None]
    cn = cn_p[:B, :H][None]
    return out, (hn, cn)


def lstm_net_apply(x, h0, c0, packed):
    return lstm_net_forward(
        x, h0, c0,
        packed["wih"], packed["whh"], packed["b"],
        packed["fcw"], packed["fcb"],
        H=packed["H"], O=packed["O"])


def init_params(key, input_dim, hidden_dim, output_dim):
    # PyTorch default init: U(-1/sqrt(H), 1/sqrt(H)) for LSTM,
    # U(-1/sqrt(fan_in), 1/sqrt(fan_in)) for Linear.
    ks = jax.random.split(key, 6)
    k_lstm = 1.0 / jnp.sqrt(hidden_dim)
    k_fc = 1.0 / jnp.sqrt(hidden_dim)
    u = lambda k, shape, s: jax.random.uniform(k, shape, jnp.float32, -s, s)
    return {
        "weight_ih": u(ks[0], (4 * hidden_dim, input_dim), k_lstm),
        "weight_hh": u(ks[1], (4 * hidden_dim, hidden_dim), k_lstm),
        "bias_ih": u(ks[2], (4 * hidden_dim,), k_lstm),
        "bias_hh": u(ks[3], (4 * hidden_dim,), k_lstm),
        "fc_w": u(ks[4], (output_dim, hidden_dim), k_fc),
        "fc_b": u(ks[5], (output_dim,), k_fc),
    }


def _reference_forward(x, h0, c0, p):
    # Pure-JAX reference of the same math (sanity check).
    H = p["weight_hh"].shape[1]
    h, c = h0[0], c0[0]
    for t in range(x.shape[1]):
        g = x[:, t, :] @ p["weight_ih"].T + h @ p["weight_hh"].T \
            + p["bias_ih"] + p["bias_hh"]
        i_g = jax.nn.sigmoid(g[:, 0:H])
        f_g = jax.nn.sigmoid(g[:, H:2 * H])
        g_g = jnp.tanh(g[:, 2 * H:3 * H])
        o_g = jax.nn.sigmoid(g[:, 3 * H:4 * H])
        c = f_g * c + i_g * g_g
        h = o_g * jnp.tanh(c)
    out = h @ p["fc_w"].T + p["fc_b"]
    return out, h, c


if __name__ == "__main__":
    input_dim, hidden_dim, output_dim, num_layers = 24, 10, 1, 1
    B, T = 2, 8

    key = jax.random.PRNGKey(0)
    k_x, k_h, k_c, k_p = jax.random.split(key, 4)
    x = jax.random.normal(k_x, (B, T, input_dim), jnp.float32)
    h0 = jax.random.normal(k_h, (num_layers, B, hidden_dim), jnp.float32)
    c0 = jax.random.normal(k_c, (num_layers, B, hidden_dim), jnp.float32)
    params = init_params(k_p, input_dim, hidden_dim, output_dim)

    packed = prepare_params(params)       # one-time layout work, not per-call

    out, (hn, cn) = lstm_net_apply(x, h0, c0, packed)
    jax.block_until_ready((out, hn, cn))

    # sanity check against a pure-JAX re-implementation of the same math
    ref_out, ref_h, ref_c = _reference_forward(x, h0, c0, params)
    assert jnp.allclose(out, ref_out, atol=1e-4), "fc output mismatch"
    assert jnp.allclose(hn[0], ref_h, atol=1e-4), "hn mismatch"
    assert jnp.allclose(cn[0], ref_c, atol=1e-4), "cn mismatch"
    assert out.shape == (B, output_dim)
    assert hn.shape == (num_layers, B, hidden_dim)
    assert cn.shape == (num_layers, B, hidden_dim)

    print("KERNEL_OK")
</pallas_src>

<mosaic_0001>
module attributes {stable_mosaic.version = 11 : i64} {
  func.func @lstm_net_kernel(%arg0: memref<64x24xf32, #tpu.memory_space<vmem>>, %arg1: memref<8x32xf32, #tpu.memory_space<vmem>>, %arg2: memref<8x32xf32, #tpu.memory_space<vmem>>, %arg3: memref<24x128xf32, #tpu.memory_space<vmem>>, %arg4: memref<32x128xf32, #tpu.memory_space<vmem>>, %arg5: memref<1x128xf32, #tpu.memory_space<vmem>>, %arg6: memref<32x128xf32, #tpu.memory_space<vmem>>, %arg7: memref<1x128xf32, #tpu.memory_space<vmem>>, %arg8: memref<8x128xf32, #tpu.memory_space<vmem>>, %arg9: memref<8x32xf32, #tpu.memory_space<vmem>>, %arg10: memref<8x32xf32, #tpu.memory_space<vmem>>, %arg11: memref<64x128xf32, #tpu.memory_space<vmem>>) attributes {dimension_semantics = [], scalar_prefetch = 0 : i64, scratch_operands = 1 : i64, tpu.core_type = #tpu.core_type<tc>} {
    %c0 = arith.constant 0 : index
    %c0_0 = arith.constant 0 : index
    %0 = vector.load %arg0[%c0, %c0_0] : memref<64x24xf32, #tpu.memory_space<vmem>>, vector<64x24xf32>
    %c0_1 = arith.constant 0 : index
    %c0_2 = arith.constant 0 : index
    %1 = vector.load %arg3[%c0_1, %c0_2] : memref<24x128xf32, #tpu.memory_space<vmem>>, vector<24x128xf32>
    %cst = arith.constant dense<0.000000e+00> : vector<64x128xf32>
    %2 = tpu.matmul %0, %1, %cst {dimension_numbers = #tpu.dot_dimension_numbers<[1], [0], [0], [1], [0, 0, 1, 1], [], []>} : vector<64x24xf32>, vector<24x128xf32>, vector<64x128xf32> -> vector<64x128xf32>
    %c0_3 = arith.constant 0 : index
    %c0_4 = arith.constant 0 : index
    %3 = vector.load %arg5[%c0_3, %c0_4] : memref<1x128xf32, #tpu.memory_space<vmem>>, vector<1x128xf32>
    %4 = vector.broadcast %3 : vector<1x128xf32> to vector<64x128xf32>
    %5 = arith.addf %2, %4 : vector<64x128xf32>
    %c0_5 = arith.constant 0 : index
    %c0_6 = arith.constant 0 : index
    %6 = vector.load %arg11[%c0_5, %c0_6] : memref<64x128xf32, #tpu.memory_space<vmem>>, vector<64x128xf32>
    tpu.vector_store %arg11[%c0_5, %c0_6], %5 {strides = array<i32>} : memref<64x128xf32, #tpu.memory_space<vmem>>, vector<64x128xf32>,
    %c0_7 = arith.constant 0 : index
    %c0_8 = arith.constant 0 : index
    %7 = vector.load %arg1[%c0_7, %c0_8] : memref<8x32xf32, #tpu.memory_space<vmem>>, vector<8x32xf32>
    %c0_9 = arith.constant 0 : index
    %c0_10 = arith.constant 0 : index
    %8 = vector.load %arg2[%c0_9, %c0_10] : memref<8x32xf32, #tpu.memory_space<vmem>>, vector<8x32xf32>
    %c0_i32 = arith.constant 0 : i32
    %c8_i32 = arith.constant 8 : i32
    %9 = arith.muli %c0_i32, %c8_i32 : i32
    %10 = tpu.assume_multiple %9, 8 : i32
    %11 = arith.index_cast %10 : i32 to index
    %c0_11 = arith.constant 0 : index
    %12 = vector.load %arg11[%11, %c0_11] : memref<64x128xf32, #tpu.memory_space<vmem>>, vector<8x128xf32>
    %c0_12 = arith.constant 0 : index
    %c0_13 = arith.constant 0 : index
    %13 = vector.load %arg4[%c0_12, %c0_13] : memref<32x128xf32, #tpu.memory_space<vmem>>, vector<32x128xf32>
    %cst_14 = arith.constant dense<0.000000e+00> : vector<8x128xf32>
    %14 = tpu.matmul %7, %13, %cst_14 {dimension_numbers = #tpu.dot_dimension_numbers<[1], [0], [0], [1], [0, 0, 1, 1], [], []>} : vector<8x32xf32>, vector<32x128xf32>, vector<8x128xf32> -> vector<8x128xf32>
    %15 = arith.addf %12, %14 : vector<8x128xf32>
    %cst_15 = arith.constant 5.000000e-01 : f32
    %16 = vector.broadcast %cst_15 : f32 to vector<8x128xf32>
    %17 = arith.mulf %16, %15 : vector<8x128xf32>
    %18 = math.tanh %17 : vector<8x128xf32>
    %cst_16 = arith.constant 5.000000e-01 : f32
    %19 = vector.broadcast %cst_16 : f32 to vector<8x128xf32>
    %20 = arith.mulf %19, %18 : vector<8x128xf32>
    %cst_17 = arith.constant 5.000000e-01 : f32
    %21 = vector.broadcast %cst_17 : f32 to vector<8x128xf32>
    %22 = arith.addf %20, %21 : vector<8x128xf32>
    %23 = math.tanh %15 : vector<8x128xf32>
    %24 = vector.extract_strided_slice %22 {offsets = [0, 0], sizes = [8, 32], strides = [1, 1]} : vector<8x128xf32> to vector<8x32xf32>
    %25 = vector.extract_strided_slice %22 {offsets = [0, 32], sizes = [8, 32], strides = [1, 1]} : vector<8x128xf32> to vector<8x32xf32>
    %26 = vector.extract_strided_slice %23 {offsets = [0, 64], sizes = [8, 32], strides = [1, 1]} : vector<8x128xf32> to vector<8x32xf32>
    %27 = vector.extract_strided_slice %22 {offsets = [0, 96], sizes = [8, 32], strides = [1, 1]} : vector<8x128xf32> to vector<8x32xf32>
    %28 = arith.mulf %25, %8 : vector<8x32xf32>
    %29 = arith.mulf %24, %26 : vector<8x32xf32>
    %30 = arith.addf %28, %29 : vector<8x32xf32>
    %31 = math.tanh %30 : vector<8x32xf32>
    %32 = arith.mulf %27, %31 : vector<8x32xf32>
    %c1_i32 = arith.constant 1 : i32
    %c8_i32_18 = arith.constant 8 : i32
    %33 = arith.muli %c1_i32, %c8_i32_18 : i32
    %34 = tpu.assume_multiple %33, 8 : i32
    %35 = arith.index_cast %34 : i32 to index
    %c0_19 = arith.constant 0 : index
    %36 = vector.load %arg11[%35, %c0_19] : memref<64x128xf32, #tpu.memory_space<vmem>>, vector<8x128xf32>
    %c0_20 = arith.constant 0 : index
    %c0_21 = arith.constant 0 : index
    %37 = vector.load %arg4[%c0_20, %c0_21] : memref<32x128xf32, #tpu.memory_space<vmem>>, vector<32x128xf32>
    %cst_22 = arith.constant dense<0.000000e+00> : vector<8x128xf32>
    %38 = tpu.matmul %32, %37, %cst_22 {dimension_numbers = #tpu.dot_dimension_numbers<[1], [0], [0], [1], [0, 0, 1, 1], [], []>} : vector<8x32xf32>, vector<32x128xf32>, vector<8x128xf32> -> vector<8x128xf32>
    %39 = arith.addf %36, %38 : vector<8x128xf32>
    %cst_23 = arith.constant 5.000000e-01 : f32
    %40 = vector.broadcast %cst_23 : f32 to vector<8x128xf32>
    %41 = arith.mulf %40, %39 : vector<8x128xf32>
    %42 = math.tanh %41 : vector<8x128xf32>
    %cst_24 = arith.constant 5.000000e-01 : f32
    %43 = vector.broadcast %cst_24 : f32 to vector<8x128xf32>
    %44 = arith.mulf %43, %42 : vector<8x128xf32>
    %cst_25 = arith.constant 5.000000e-01 : f32
    %45 = vector.broadcast %cst_25 : f32 to vector<8x128xf32>
    %46 = arith.addf %44, %45 : vector<8x128xf32>
    %47 = math.tanh %39 : vector<8x128xf32>
    %48 = vector.extract_strided_slice %46 {offsets = [0, 0], sizes = [8, 32], strides = [1, 1]} : vector<8x128xf32> to vector<8x32xf32>
    %49 = vector.extract_strided_slice %46 {offsets = [0, 32], sizes = [8, 32], strides = [1, 1]} : vector<8x128xf32> to vector<8x32xf32>
    %50 = vector.extract_strided_slice %47 {offsets = [0, 64], sizes = [8, 32], strides = [1, 1]} : vector<8x128xf32> to vector<8x32xf32>
    %51 = vector.extract_strided_slice %46 {offsets = [0, 96], sizes = [8, 32], strides = [1, 1]} : vector<8x128xf32> to vector<8x32xf32>
    %52 = arith.mulf %49, %30 : vector<8x32xf32>
    %53 = arith.mulf %48, %50 : vector<8x32xf32>
    %54 = arith.addf %52, %53 : vector<8x32xf32>
    %55 = math.tanh %54 : vector<8x32xf32>
    %56 = arith.mulf %51, %55 : vector<8x32xf32>
    %c2_i32 = arith.constant 2 : i32
    %c8_i32_26 = arith.constant 8 : i32
    %57 = arith.muli %c2_i32, %c8_i32_26 : i32
    %58 = tpu.assume_multiple %57, 8 : i32
    %59 = arith.index_cast %58 : i32 to index
    %c0_27 = arith.constant 0 : index
    %60 = vector.load %arg11[%59, %c0_27] : memref<64x128xf32, #tpu.memory_space<vmem>>, vector<8x128xf32>
    %c0_28 = arith.constant 0 : index
    %c0_29 = arith.constant 0 : index
    %61 = vector.load %arg4[%c0_28, %c0_29] : memref<32x128xf32, #tpu.memory_space<vmem>>, vector<32x128xf32>
    %cst_30 = arith.constant dense<0.000000e+00> : vector<8x128xf32>
    %62 = tpu.matmul %56, %61, %cst_30 {dimension_numbers = #tpu.dot_dimension_numbers<[1], [0], [0], [1], [0, 0, 1, 1], [], []>} : vector<8x32xf32>, vector<32x128xf32>, vector<8x128xf32> -> vector<8x128xf32>
    %63 = arith.addf %60, %62 : vector<8x128xf32>
    %cst_31 = arith.constant 5.000000e-01 : f32
    %64 = vector.broadcast %cst_31 : f32 to vector<8x128xf32>
    %65 = arith.mulf %64, %63 : vector<8x128xf32>
    %66 = math.tanh %65 : vector<8x128xf32>
    %cst_32 = arith.constant 5.000000e-01 : f32
    %67 = vector.broadcast %cst_32 : f32 to vector<8x128xf32>
    %68 = arith.mulf %67, %66 : vector<8x128xf32>
    %cst_33 = arith.constant 5.000000e-01 : f32
    %69 = vector.broadcast %cst_33 : f32 to vector<8x128xf32>
    %70 = arith.addf %68, %69 : vector<8x128xf32>
    %71 = math.tanh %63 : vector<8x128xf32>
    %72 = vector.extract_strided_slice %70 {offsets = [0, 0], sizes = [8, 32], strides = [1, 1]} : vector<8x128xf32> to vector<8x32xf32>
    %73 = vector.extract_strided_slice %70 {offsets = [0, 32], sizes = [8, 32], strides = [1, 1]} : vector<8x128xf32> to vector<8x32xf32>
    %74 = vector.extract_strided_slice %71 {offsets = [0, 64], sizes = [8, 32], strides = [1, 1]} : vector<8x128xf32> to vector<8x32xf32>
    %75 = vector.extract_strided_slice %70 {offsets = [0, 96], sizes = [8, 32], strides = [1, 1]} : vector<8x128xf32> to vector<8x32xf32>
    %76 = arith.mulf %73, %54 : vector<8x32xf32>
    %77 = arith.mulf %72, %74 : vector<8x32xf32>
    %78 = arith.addf %76, %77 : vector<8x32xf32>
    %79 = math.tanh %78 : vector<8x32xf32>
    %80 = arith.mulf %75, %79 : vector<8x32xf32>
    %c3_i32 = arith.constant 3 : i32
    %c8_i32_34 = arith.constant 8 : i32
    %81 = arith.muli %c3_i32, %c8_i32_34 : i32
    %82 = tpu.assume_multiple %81, 8 : i32
    %83 = arith.index_cast %82 : i32 to index
    %c0_35 = arith.constant 0 : index
    %84 = vector.load %arg11[%83, %c0_35] : memref<64x128xf32, #tpu.memory_space<vmem>>, vector<8x128xf32>
    %c0_36 = arith.constant 0 : index
    %c0_37 = arith.constant 0 : index
    %85 = vector.load %arg4[%c0_36, %c0_37] : memref<32x128xf32, #tpu.memory_space<vmem>>, vector<32x128xf32>
    %cst_38 = arith.constant dense<0.000000e+00> : vector<8x128xf32>
    %86 = tpu.matmul %80, %85, %cst_38 {dimension_numbers = #tpu.dot_dimension_numbers<[1], [0], [0], [1], [0, 0, 1, 1], [], []>} : vector<8x32xf32>, vector<32x128xf32>, vector<8x128xf32> -> vector<8x128xf32>
    %87 = arith.addf %84, %86 : vector<8x128xf32>
    %cst_39 = arith.constant 5.000000e-01 : f32
    %88 = vector.broadcast %cst_39 : f32 to vector<8x128xf32>
    %89 = arith.mulf %88, %87 : vector<8x128xf32>
    %90 = math.tanh %89 : vector<8x128xf32>
    %cst_40 = arith.constant 5.000000e-01 : f32
    %91 = vector.broadcast %cst_40 : f32 to vector<8x128xf32>
    %92 = arith.mulf %91, %90 : vector<8x128xf32>
    %cst_41 = arith.constant 5.000000e-01 : f32
    %93 = vector.broadcast %cst_41 : f32 to vector<8x128xf32>
    %94 = arith.addf %92, %93 : vector<8x128xf32>
    %95 = math.tanh %87 : vector<8x128xf32>
    %96 = vector.extract_strided_slice %94 {offsets = [0, 0], sizes = [8, 32], strides = [1, 1]} : vector<8x128xf32> to vector<8x32xf32>
    %97 = vector.extract_strided_slice %94 {offsets = [0, 32], sizes = [8, 32], strides = [1, 1]} : vector<8x128xf32> to vector<8x32xf32>
    %98 = vector.extract_strided_slice %95 {offsets = [0, 64], sizes = [8, 32], strides = [1, 1]} : vector<8x128xf32> to vector<8x32xf32>
    %99 = vector.extract_strided_slice %94 {offsets = [0, 96], sizes = [8, 32], strides = [1, 1]} : vector<8x128xf32> to vector<8x32xf32>
    %100 = arith.mulf %97, %78 : vector<8x32xf32>
    %101 = arith.mulf %96, %98 : vector<8x32xf32>
    %102 = arith.addf %100, %101 : vector<8x32xf32>
    %103 = math.tanh %102 : vector<8x32xf32>
    %104 = arith.mulf %99, %103 : vector<8x32xf32>
    %c4_i32 = arith.constant 4 : i32
    %c8_i32_42 = arith.constant 8 : i32
    %105 = arith.muli %c4_i32, %c8_i32_42 : i32
    %106 = tpu.assume_multiple %105, 8 : i32
    %107 = arith.index_cast %106 : i32 to index
    %c0_43 = arith.constant 0 : index
    %108 = vector.load %arg11[%107, %c0_43] : memref<64x128xf32, #tpu.memory_space<vmem>>, vector<8x128xf32>
    %c0_44 = arith.constant 0 : index
    %c0_45 = arith.constant 0 : index
    %109 = vector.load %arg4[%c0_44, %c0_45] : memref<32x128xf32, #tpu.memory_space<vmem>>, vector<32x128xf32>
    %cst_46 = arith.constant dense<0.000000e+00> : vector<8x128xf32>
    %110 = tpu.matmul %104, %109, %cst_46 {dimension_numbers = #tpu.dot_dimension_numbers<[1], [0], [0], [1], [0, 0, 1, 1], [], []>} : vector<8x32xf32>, vector<32x128xf32>, vector<8x128xf32> -> vector<8x128xf32>
    %111 = arith.addf %108, %110 : vector<8x128xf32>
    %cst_47 = arith.constant 5.000000e-01 : f32
    %112 = vector.broadcast %cst_47 : f32 to vector<8x128xf32>
    %113 = arith.mulf %112, %111 : vector<8x128xf32>
    %114 = math.tanh %113 : vector<8x128xf32>
    %cst_48 = arith.constant 5.000000e-01 : f32
    %115 = vector.broadcast %cst_48 : f32 to vector<8x128xf32>
    %116 = arith.mulf %115, %114 : vector<8x128xf32>
    %cst_49 = arith.constant 5.000000e-01 : f32
    %117 = vector.broadcast %cst_49 : f32 to vector<8x128xf32>
    %118 = arith.addf %116, %117 : vector<8x128xf32>
    %119 = math.tanh %111 : vector<8x128xf32>
    %120 = vector.extract_strided_slice %118 {offsets = [0, 0], sizes = [8, 32], strides = [1, 1]} : vector<8x128xf32> to vector<8x32xf32>
    %121 = vector.extract_strided_slice %118 {offsets = [0, 32], sizes = [8, 32], strides = [1, 1]} : vector<8x128xf32> to vector<8x32xf32>
    %122 = vector.extract_strided_slice %119 {offsets = [0, 64], sizes = [8, 32], strides = [1, 1]} : vector<8x128xf32> to vector<8x32xf32>
    %123 = vector.extract_strided_slice %118 {offsets = [0, 96], sizes = [8, 32], strides = [1, 1]} : vector<8x128xf32> to vector<8x32xf32>
    %124 = arith.mulf %121, %102 : vector<8x32xf32>
    %125 = arith.mulf %120, %122 : vector<8x32xf32>
    %126 = arith.addf %124, %125 : vector<8x32xf32>
    %127 = math.tanh %126 : vector<8x32xf32>
    %128 = arith.mulf %123, %127 : vector<8x32xf32>
    %c5_i32 = arith.constant 5 : i32
    %c8_i32_50 = arith.constant 8 : i32
    %129 = arith.muli %c5_i32, %c8_i32_50 : i32
    %130 = tpu.assume_multiple %129, 8 : i32
    %131 = arith.index_cast %130 : i32 to index
    %c0_51 = arith.constant 0 : index
    %132 = vector.load %arg11[%131, %c0_51] : memref<64x128xf32, #tpu.memory_space<vmem>>, vector<8x128xf32>
    %c0_52 = arith.constant 0 : index
    %c0_53 = arith.constant 0 : index
    %133 = vector.load %arg4[%c0_52, %c0_53] : memref<32x128xf32, #tpu.memory_space<vmem>>, vector<32x128xf32>
    %cst_54 = arith.constant dense<0.000000e+00> : vector<8x128xf32>
    %134 = tpu.matmul %128, %133, %cst_54 {dimension_numbers = #tpu.dot_dimension_numbers<[1], [0], [0], [1], [0, 0, 1, 1], [], []>} : vector<8x32xf32>, vector<32x128xf32>, vector<8x128xf32> -> vector<8x128xf32>
    %135 = arith.addf %132, %134 : vector<8x128xf32>
    %cst_55 = arith.constant 5.000000e-01 : f32
    %136 = vector.broadcast %cst_55 : f32 to vector<8x128xf32>
    %137 = arith.mulf %136, %135 : vector<8x128xf32>
    %138 = math.tanh %137 : vector<8x128xf32>
    %cst_56 = arith.constant 5.000000e-01 : f32
    %139 = vector.broadcast %cst_56 : f32 to vector<8x128xf32>
    %140 = arith.mulf %139, %138 : vector<8x128xf32>
    %cst_57 = arith.constant 5.000000e-01 : f32
    %141 = vector.broadcast %cst_57 : f32 to vector<8x128xf32>
    %142 = arith.addf %140, %141 : vector<8x128xf32>
    %143 = math.tanh %135 : vector<8x128xf32>
    %144 = vector.extract_strided_slice %142 {offsets = [0, 0], sizes = [8, 32], strides = [1, 1]} : vector<8x128xf32> to vector<8x32xf32>
    %145 = vector.extract_strided_slice %142 {offsets = [0, 32], sizes = [8, 32], strides = [1, 1]} : vector<8x128xf32> to vector<8x32xf32>
    %146 = vector.extract_strided_slice %143 {offsets = [0, 64], sizes = [8, 32], strides = [1, 1]} : vector<8x128xf32> to vector<8x32xf32>
    %147 = vector.extract_strided_slice %142 {offsets = [0, 96], sizes = [8, 32], strides = [1, 1]} : vector<8x128xf32> to vector<8x32xf32>
    %148 = arith.mulf %145, %126 : vector<8x32xf32>
    %149 = arith.mulf %144, %146 : vector<8x32xf32>
    %150 = arith.addf %148, %149 : vector<8x32xf32>
    %151 = math.tanh %150 : vector<8x32xf32>
    %152 = arith.mulf %147, %151 : vector<8x32xf32>
    %c6_i32 = arith.constant 6 : i32
    %c8_i32_58 = arith.constant 8 : i32
    %153 = arith.muli %c6_i32, %c8_i32_58 : i32
    %154 = tpu.assume_multiple %153, 8 : i32
    %155 = arith.index_cast %154 : i32 to index
    %c0_59 = arith.constant 0 : index
    %156 = vector.load %arg11[%155, %c0_59] : memref<64x128xf32, #tpu.memory_space<vmem>>, vector<8x128xf32>
    %c0_60 = arith.constant 0 : index
    %c0_61 = arith.constant 0 : index
    %157 = vector.load %arg4[%c0_60, %c0_61] : memref<32x128xf32, #tpu.memory_space<vmem>>, vector<32x128xf32>
    %cst_62 = arith.constant dense<0.000000e+00> : vector<8x128xf32>
    %158 = tpu.matmul %152, %157, %cst_62 {dimension_numbers = #tpu.dot_dimension_numbers<[1], [0], [0], [1], [0, 0, 1, 1], [], []>} : vector<8x32xf32>, vector<32x128xf32>, vector<8x128xf32> -> vector<8x128xf32>
    %159 = arith.addf %156, %158 : vector<8x128xf32>
    %cst_63 = arith.constant 5.000000e-01 : f32
    %160 = vector.broadcast %cst_63 : f32 to vector<8x128xf32>
    %161 = arith.mulf %160, %159 : vector<8x128xf32>
    %162 = math.tanh %161 : vector<8x128xf32>
    %cst_64 = arith.constant 5.000000e-01 : f32
    %163 = vector.broadcast %cst_64 : f32 to vector<8x128xf32>
    %164 = arith.mulf %163, %162 : vector<8x128xf32>
    %cst_65 = arith.constant 5.000000e-01 : f32
    %165 = vector.broadcast %cst_65 : f32 to vector<8x128xf32>
    %166 = arith.addf %164, %165 : vector<8x128xf32>
    %167 = math.tanh %159 : vector<8x128xf32>
    %168 = vector.extract_strided_slice %166 {offsets = [0, 0], sizes = [8, 32], strides = [1, 1]} : vector<8x128xf32> to vector<8x32xf32>
    %169 = vector.extract_strided_slice %166 {offsets = [0, 32], sizes = [8, 32], strides = [1, 1]} : vector<8x128xf32> to vector<8x32xf32>
    %170 = vector.extract_strided_slice %167 {offsets = [0, 64], sizes = [8, 32], strides = [1, 1]} : vector<8x128xf32> to vector<8x32xf32>
    %171 = vector.extract_strided_slice %166 {offsets = [0, 96], sizes = [8, 32], strides = [1, 1]} : vector<8x128xf32> to vector<8x32xf32>
    %172 = arith.mulf %169, %150 : vector<8x32xf32>
    %173 = arith.mulf %168, %170 : vector<8x32xf32>
    %174 = arith.addf %172, %173 : vector<8x32xf32>
    %175 = math.tanh %174 : vector<8x32xf32>
    %176 = arith.mulf %171, %175 : vector<8x32xf32>
    %c7_i32 = arith.constant 7 : i32
    %c8_i32_66 = arith.constant 8 : i32
    %177 = arith.muli %c7_i32, %c8_i32_66 : i32
    %178 = tpu.assume_multiple %177, 8 : i32
    %179 = arith.index_cast %178 : i32 to index
    %c0_67 = arith.constant 0 : index
    %180 = vector.load %arg11[%179, %c0_67] : memref<64x128xf32, #tpu.memory_space<vmem>>, vector<8x128xf32>
    %c0_68 = arith.constant 0 : index
    %c0_69 = arith.constant 0 : index
    %181 = vector.load %arg4[%c0_68, %c0_69] : memref<32x128xf32, #tpu.memory_space<vmem>>, vector<32x128xf32>
    %cst_70 = arith.constant dense<0.000000e+00> : vector<8x128xf32>
    %182 = tpu.matmul %176, %181, %cst_70 {dimension_numbers = #tpu.dot_dimension_numbers<[1], [0], [0], [1], [0, 0, 1, 1], [], []>} : vector<8x32xf32>, vector<32x128xf32>, vector<8x128xf32> -> vector<8x128xf32>
    %183 = arith.addf %180, %182 : vector<8x128xf32>
    %cst_71 = arith.constant 5.000000e-01 : f32
    %184 = vector.broadcast %cst_71 : f32 to vector<8x128xf32>
    %185 = arith.mulf %184, %183 : vector<8x128xf32>
    %186 = math.tanh %185 : vector<8x128xf32>
    %cst_72 = arith.constant 5.000000e-01 : f32
    %187 = vector.broadcast %cst_72 : f32 to vector<8x128xf32>
    %188 = arith.mulf %187, %186 : vector<8x128xf32>
    %cst_73 = arith.constant 5.000000e-01 : f32
    %189 = vector.broadcast %cst_73 : f32 to vector<8x128xf32>
    %190 = arith.addf %188, %189 : vector<8x128xf32>
    %191 = math.tanh %183 : vector<8x128xf32>
    %192 = vector.extract_strided_slice %190 {offsets = [0, 0], sizes = [8, 32], strides = [1, 1]} : vector<8x128xf32> to vector<8x32xf32>
    %193 = vector.extract_strided_slice %190 {offsets = [0, 32], sizes = [8, 32], strides = [1, 1]} : vector<8x128xf32> to vector<8x32xf32>
    %194 = vector.extract_strided_slice %191 {offsets = [0, 64], sizes = [8, 32], strides = [1, 1]} : vector<8x128xf32> to vector<8x32xf32>
    %195 = vector.extract_strided_slice %190 {offsets = [0, 96], sizes = [8, 32], strides = [1, 1]} : vector<8x128xf32> to vector<8x32xf32>
    %196 = arith.mulf %193, %174 : vector<8x32xf32>
    %197 = arith.mulf %192, %194 : vector<8x32xf32>
    %198 = arith.addf %196, %197 : vector<8x32xf32>
    %199 = math.tanh %198 : vector<8x32xf32>
    %200 = arith.mulf %195, %199 : vector<8x32xf32>
    %c8_i32_74 = arith.constant 8 : i32
    %c0_75 = arith.constant 0 : index
    %c0_76 = arith.constant 0 : index
    %201 = vector.load %arg9[%c0_75, %c0_76] : memref<8x32xf32, #tpu.memory_space<vmem>>, vector<8x32xf32>
    tpu.vector_store %arg9[%c0_75, %c0_76], %200 {strides = array<i32>} : memref<8x32xf32, #tpu.memory_space<vmem>>, vector<8x32xf32>,
    %c0_77 = arith.constant 0 : index
    %c0_78 = arith.constant 0 : index
    %202 = vector.load %arg10[%c0_77, %c0_78] : memref<8x32xf32, #tpu.memory_space<vmem>>, vector<8x32xf32>
    tpu.vector_store %arg10[%c0_77, %c0_78], %198 {strides = array<i32>} : memref<8x32xf32, #tpu.memory_space<vmem>>, vector<8x32xf32>,
    %c0_79 = arith.constant 0 : index
    %c0_80 = arith.constant 0 : index
    %203 = vector.load %arg6[%c0_79, %c0_80] : memref<32x128xf32, #tpu.memory_space<vmem>>, vector<32x128xf32>
    %cst_81 = arith.constant dense<0.000000e+00> : vector<8x128xf32>
    %204 = tpu.matmul %200, %203, %cst_81 {dimension_numbers = #tpu.dot_dimension_numbers<[1], [0], [0], [1], [0, 0, 1, 1], [], []>} : vector<8x32xf32>, vector<32x128xf32>, vector<8x128xf32> -> vector<8x128xf32>
    %c0_82 = arith.constant 0 : index
    %c0_83 = arith.constant 0 : index
    %205 = vector.load %arg7[%c0_82, %c0_83] : memref<1x128xf32, #tpu.memory_space<vmem>>, vector<1x128xf32>
    %206 = vector.broadcast %205 : vector<1x128xf32> to vector<8x128xf32>
    %207 = arith.addf %204, %206 : vector<8x128xf32>
    %c0_84 = arith.constant 0 : index
    %c0_85 = arith.constant 0 : index
    %208 = vector.load %arg8[%c0_84, %c0_85] : memref<8x128xf32, #tpu.memory_space<vmem>>, vector<8x128xf32>
    tpu.vector_store %arg8[%c0_84, %c0_85], %207 {strides = array<i32>} : memref<8x128xf32, #tpu.memory_space<vmem>>, vector<8x128xf32>,
    return
  }
}

</mosaic_0001>

<llo_original>
// kernel: lstm_net_forward.1
$region0: #{lstm_net_forward.1}
  #allocation0 [shape = 'u32[]', space=smem, size = 0x4, offset = 0x4, fixed_abs, tag = 'smem constant byte address 0x4 - core index']
  #allocation1 [shape = 'u32[72,128]{1,0:T(1,128)}', space=vmem, size = 0x9000, scoped, tag = 'internal scratch']
  #allocation2 [shape = 'f32[64,128]{1,0:T(8,128)}', space=vmem, size = 0x8000, scoped, tag = 'scratch operand']
  %s0 = inlined_call_operand.vmem [shape: f32[64,24], index: 0, kind: input, shape index: {}]
  %s1 = inlined_call_operand.vmem [shape: f32[8,32], index: 1, kind: input, shape index: {}]
  %s2 = inlined_call_operand.vmem [shape: f32[8,32], index: 2, kind: input, shape index: {}]
  %s3 = inlined_call_operand.vmem [shape: f32[24,128], index: 3, kind: input, shape index: {}]
  %s4 = inlined_call_operand.vmem [shape: f32[32,128], index: 4, kind: input, shape index: {}]
  %s5 = inlined_call_operand.vmem [shape: f32[1,128], index: 5, kind: input, shape index: {}]
  %s6 = inlined_call_operand.vmem [shape: f32[32,128], index: 6, kind: input, shape index: {}]
  %s7 = inlined_call_operand.vmem [shape: f32[1,128], index: 7, kind: input, shape index: {}]
  %s8 = inlined_call_operand.vmem [shape: f32[8,128], index: 8, kind: output, shape index: {0}]
  %s9 = inlined_call_operand.vmem [shape: f32[8,32], index: 9, kind: output, shape index: {1}]
  %s10 = inlined_call_operand.vmem [shape: f32[8,32], index: 10, kind: output, shape index: {2}]
  %11 = xla_tuple %s8, %s9, %s10
  %s12 = sld [smem:[#allocation0]]
  $region58: #{lstm_net_forward.1} parent=0
    _
  %s14 = ssub.s32 1, %s12
  %s15 = scalar_select 0, %s14, %s12
  // Predicated region
  $region2: #{lstm_net_forward.1} parent=0 // pred_check
    _
  $region3: #{lstm_net_forward.1} parent=0 // pred_check_branch
    %17 = sbr.rel (0) target = $region5
  $region4: #{lstm_net_forward.1} parent=0 // pred_region
    _
  $region5: #{lstm_net_forward.1} parent=0 // pred_fallthru
    _
  // Predicated region
  $region6: #{lstm_net_forward.1} parent=0 // pred_check
    _
  $region7: #{lstm_net_forward.1} parent=0 // pred_check_branch
    %19 = sbr.rel (0) target = $region9
  $region8: #{lstm_net_forward.1} parent=0 // pred_region
    _
  $region9: #{lstm_net_forward.1} parent=0 // pred_fallthru
    _
  // Predicated region
  $region10: #{lstm_net_forward.1} parent=0 // pred_check
    _
  $region11: #{lstm_net_forward.1} parent=0 // pred_check_branch
    %21 = sbr.rel (0) target = $region13
  $region12: #{lstm_net_forward.1} parent=0 // pred_region
    _
  $region13: #{lstm_net_forward.1} parent=0 // pred_fallthru
    _
  // Predicated region
  $region14: #{lstm_net_forward.1} parent=0 // pred_check
    _
  $region15: #{lstm_net_forward.1} parent=0 // pred_check_branch
    %23 = sbr.rel (0) target = $region17
  $region16: #{lstm_net_forward.1} parent=0 // pred_region
    _
  $region17: #{lstm_net_forward.1} parent=0 // pred_fallthru
    _
  // Predicated region
  $region18: #{lstm_net_forward.1} parent=0 // pred_check
    _
  $region19: #{lstm_net_forward.1} parent=0 // pred_check_branch
    %25 = sbr.rel (0) target = $region21
  $region20: #{lstm_net_forward.1} parent=0 // pred_region
    _
  $region21: #{lstm_net_forward.1} parent=0 // pred_fallthru
    _
  // Predicated region
  $region22: #{lstm_net_forward.1} parent=0 // pred_check
    _
  $region23: #{lstm_net_forward.1} parent=0 // pred_check_branch
    %27 = sbr.rel (0) target = $region25
  $region24: #{lstm_net_forward.1} parent=0 // pred_region
    _
  $region25: #{lstm_net_forward.1} parent=0 // pred_fallthru
    _
  // Predicated region
  $region26: #{lstm_net_forward.1} parent=0 // pred_check
    _
  $region27: #{lstm_net_forward.1} parent=0 // pred_check_branch
    %29 = sbr.rel (0) target = $region29
  $region28: #{lstm_net_forward.1} parent=0 // pred_region
    _
  $region29: #{lstm_net_forward.1} parent=0 // pred_fallthru
    _
  // Predicated region
  $region30: #{lstm_net_forward.1} parent=0 // pred_check
    _
  $region31: #{lstm_net_forward.1} parent=0 // pred_check_branch
    %31 = sbr.rel (0) target = $region33
  $region32: #{lstm_net_forward.1} parent=0 // pred_region
    _
  $region33: #{lstm_net_forward.1} parent=0 // pred_fallthru
    _
  %v32 = vld [vmem:[%s0] sm:$0xff]
  %v33 = vld [vmem:[%s0 + $0x8] sm:$0xff]
  %v34 = vld [vmem:[%s0 + $0x10] sm:$0xff]
  %v35 = vld [vmem:[%s0 + $0x18] sm:$0xff]
  %v36 = vld [vmem:[%s0 + $0x20] sm:$0xff]
  %v37 = vld [vmem:[%s0 + $0x28] sm:$0xff]
  %v38 = vld [vmem:[%s0 + $0x30] sm:$0xff]
  %v39 = vld [vmem:[%s0 + $0x38] sm:$0xff]
  %v40 = vld [vmem:[%s3] sm:$0xff]
  %v41 = vld [vmem:[%s3 + $0x8] sm:$0xff]
  %v42 = vld [vmem:[%s3 + $0x10] sm:$0xff]
  %v43 = vld [vmem:[%s5] sm:$0x1]
  %v45 = vperm.slane %v43, 0
  %vm47 = vcmask 195584
  %v49 = vsel %vm47, %v32, 0
  %v52 = vsel %vm47, %v33, 0
  %v55 = vsel %vm47, %v34, 0
  %v58 = vsel %vm47, %v35, 0
  %v61 = vsel %vm47, %v36, 0
  %v64 = vsel %vm47, %v37, 0
  %v67 = vsel %vm47, %v38, 0
  %v70 = vsel %vm47, %v39, 0
  %72 = vmatpush.msra.mxu0 0.0
  %73 = vmatpush.msra.mxu0 0.0
  %74 = vmatpush.msra.mxu0 0.0
  %75 = vmatpush.msra.mxu0 0.0
  %76 = vmatpush.msra.mxu0 0.0
  %77 = vmatpush.msra.mxu0 0.0
  %78 = vmatpush.msra.mxu0 0.0
  %79 = vmatpush.msra.mxu0 0.0
  %80 = vmatpush.msra.mxu0 0.0
  %81 = vmatpush.msra.mxu0 0.0
  %82 = vmatpush.msra.mxu0 0.0
  %83 = vmatpush.msra.mxu0 0.0
  %84 = vmatpush.msra.mxu0 0.0
  %85 = vmatpush.msra.mxu0 %v42
  %86 = vmatpush.msra.mxu0 %v41
  %87 = vmatpush.msra.mxu0 %v40
  %88 = vmatmul.f32.gmra.mxu0 %v49
  %v89 = vpop.f32.mrf.mxu0
  %v90 = vadd.f32 %v45, %v89
  %91 = vmatmul.f32.gmra.mxu0 %v52
  %v92 = vpop.f32.mrf.mxu0
  %v93 = vadd.f32 %v45, %v92
  %94 = vmatmul.f32.gmra.mxu0 %v55
  %v95 = vpop.f32.mrf.mxu0
  %v96 = vadd.f32 %v45, %v95
  %97 = vmatmul.f32.gmra.mxu0 %v58
  %v98 = vpop.f32.mrf.mxu0
  %v99 = vadd.f32 %v45, %v98
  %100 = vmatmul.f32.gmra.mxu0 %v61
  %v101 = vpop.f32.mrf.mxu0
  %v102 = vadd.f32 %v45, %v101
  %103 = vmatmul.f32.gmra.mxu0 %v64
  %v104 = vpop.f32.mrf.mxu0
  %v105 = vadd.f32 %v45, %v104
  %106 = vmatmul.f32.gmra.mxu0 %v67
  %v107 = vpop.f32.mrf.mxu0
  %v108 = vadd.f32 %v45, %v107
  %109 = vmatmul.f32.gmra.mxu0 %v70
  %v110 = vpop.f32.mrf.mxu0
  %v111 = vadd.f32 %v45, %v110
  %112 = vdwg.mxu0
  %113 = vst [vmem:[#allocation2] sm:$0xff] %v90
  %114 = vst [vmem:[#allocation2 + $0x8] sm:$0xff] %v93
  %115 = vst [vmem:[#allocation2 + $0x10] sm:$0xff] %v96
  %116 = vst [vmem:[#allocation2 + $0x18] sm:$0xff] %v99
  %117 = vst [vmem:[#allocation2 + $0x20] sm:$0xff] %v102
  %118 = vst [vmem:[#allocation2 + $0x28] sm:$0xff] %v105
  %119 = vst [vmem:[#allocation2 + $0x30] sm:$0xff] %v108
  %120 = vst [vmem:[#allocation2 + $0x38] sm:$0xff] %v111
  %v121 = vld [vmem:[%s1] sm:$0xff]
  %v122 = vld [vmem:[%s2] sm:$0xff]
  %v123 = vld [vmem:[#allocation2] sm:$0xff]
  %v124 = vld [vmem:[%s4] sm:$0xff]
  %v125 = vld [vmem:[%s4 + $0x8] sm:$0xff]
  %v126 = vld [vmem:[%s4 + $0x10] sm:$0xff]
  %v127 = vld [vmem:[%s4 + $0x18] sm:$0xff]
  %vm128 = vcmask 261120
  %v130 = vsel %vm128, %v121, 0
  %132 = vmatpush.msra.mxu0 0.0
  %133 = vmatpush.msra.mxu0 0.0
  %134 = vmatpush.msra.mxu0 0.0
  %135 = vmatpush.msra.mxu0 0.0
  %136 = vmatpush.msra.mxu0 0.0
  %137 = vmatpush.msra.mxu0 0.0
  %138 = vmatpush.msra.mxu0 0.0
  %139 = vmatpush.msra.mxu0 0.0
  %140 = vmatpush.msra.mxu0 0.0
  %141 = vmatpush.msra.mxu0 0.0
  %142 = vmatpush.msra.mxu0 0.0
  %143 = vmatpush.msra.mxu0 0.0
  %144 = vmatpush.msra.mxu0 %v127
  %145 = vmatpush.msra.mxu0 %v126
  %146 = vmatpush.msra.mxu0 %v125
  %147 = vmatpush.msra.mxu0 %v124
  %148 = vmatmul.f32.gmra.mxu0 %v130
  %v149 = vpop.f32.mrf.mxu0
  %v150 = vadd.f32 0.0, %v149
  %151 = vdwg.mxu0
  %v152 = vadd.f32 %v123, %v150
  %v153 = vmul.f32 %v152, 0.5
  %v154 = vtanh.pop %v153
  %v155 = vmul.f32 %v154, 0.5
  %v156 = vadd.f32 %v155, 0.5
  %v157 = vtanh.pop %v152
  %159 = vrot.lane.b32.xlu0 %v122, 32
  %v160 = vpop.permute.xlu0 %159
  %v162 = vmul.f32 %v156, %v160
  %164 = vrot.lane.b32.xlu0 %v157, 64
  %v165 = vpop.permute.xlu0 %164
  %v167 = vmul.f32 %v156, %v165
  %169 = vrot.lane.b32.xlu0 %v167, 32
  %v170 = vpop.permute.xlu0 %169
  %v172 = vadd.f32 %v162, %v170
  %v173 = vtanh.pop %v172
  %175 = vrot.lane.b32.xlu0 %v173, 64
  %v176 = vpop.permute.xlu0 %175
  %v178 = vmul.f32 %v156, %v176
  %s179 = scalar_lea.vmem [#allocation2], 8
  %v180 = vld [vmem:[%s179] sm:$0xff]
  %182 = vrot.lane.b32.xlu0 %v178, 32
  %v183 = vpop.permute.xlu0 %182
  %v184 = vsel %vm128, %v183, 0
  %186 = vmatpush.msra.mxu0 0.0
  %187 = vmatpush.msra.mxu0 0.0
  %188 = vmatpush.msra.mxu0 0.0
  %189 = vmatpush.msra.mxu0 0.0
  %190 = vmatpush.msra.mxu0 0.0
  %191 = vmatpush.msra.mxu0 0.0
  %192 = vmatpush.msra.mxu0 0.0
  %193 = vmatpush.msra.mxu0 0.0
  %194 = vmatpush.msra.mxu0 0.0
  %195 = vmatpush.msra.mxu0 0.0
  %196 = vmatpush.msra.mxu0 0.0
  %197 = vmatpush.msra.mxu0 0.0
  %198 = vmatpush.msra.mxu0 %v127
  %199 = vmatpush.msra.mxu0 %v126
  %200 = vmatpush.msra.mxu0 %v125
  %201 = vmatpush.msra.mxu0 %v124
  %202 = vmatmul.f32.gmra.mxu0 %v184
  %v203 = vpop.f32.mrf.mxu0
  %v204 = vadd.f32 0.0, %v203
  %205 = vdwg.mxu0
  %v206 = vadd.f32 %v180, %v204
  %v207 = vmul.f32 %v206, 0.5
  %v208 = vtanh.pop %v207
  %v209 = vmul.f32 %v208, 0.5
  %v210 = vadd.f32 %v209, 0.5
  %v211 = vtanh.pop %v206
  %v212 = vmul.f32 %v210, %v172
  %214 = vrot.lane.b32.xlu0 %v211, 64
  %v215 = vpop.permute.xlu0 %214
  %v217 = vmul.f32 %v210, %v215
  %219 = vrot.lane.b32.xlu0 %v217, 32
  %v220 = vpop.permute.xlu0 %219
  %v222 = vadd.f32 %v212, %v220
  %v223 = vtanh.pop %v222
  %225 = vrot.lane.b32.xlu0 %v223, 64
  %v226 = vpop.permute.xlu0 %225
  %v228 = vmul.f32 %v210, %v226
  %s229 = scalar_lea.vmem [#allocation2], 16
  %v230 = vld [vmem:[%s229] sm:$0xff]
  %232 = vrot.lane.b32.xlu0 %v228, 32
  %v233 = vpop.permute.xlu0 %232
  %v234 = vsel %vm128, %v233, 0
  %236 = vmatpush.msra.mxu0 0.0
  %237 = vmatpush.msra.mxu0 0.0
  %238 = vmatpush.msra.mxu0 0.0
  %239 = vmatpush.msra.mxu0 0.0
  %240 = vmatpush.msra.mxu0 0.0
  %241 = vmatpush.msra.mxu0 0.0
  %242 = vmatpush.msra.mxu0 0.0
  %243 = vmatpush.msra.mxu0 0.0
  %244 = vmatpush.msra.mxu0 0.0
  %245 = vmatpush.msra.mxu0 0.0
  %246 = vmatpush.msra.mxu0 0.0
  %247 = vmatpush.msra.mxu0 0.0
  %248 = vmatpush.msra.mxu0 %v127
  %249 = vmatpush.msra.mxu0 %v126
  %250 = vmatpush.msra.mxu0 %v125
  %251 = vmatpush.msra.mxu0 %v124
  %252 = vmatmul.f32.gmra.mxu0 %v234
  %v253 = vpop.f32.mrf.mxu0
  %v254 = vadd.f32 0.0, %v253
  %255 = vdwg.mxu0
  %v256 = vadd.f32 %v230, %v254
  %v257 = vmul.f32 %v256, 0.5
  %v258 = vtanh.pop %v257
  %v259 = vmul.f32 %v258, 0.5
  %v260 = vadd.f32 %v259, 0.5
  %v261 = vtanh.pop %v256
  %v262 = vmul.f32 %v260, %v222
  %264 = vrot.lane.b32.xlu0 %v261, 64
  %v265 = vpop.permute.xlu0 %264
  %v267 = vmul.f32 %v260, %v265
  %269 = vrot.lane.b32.xlu0 %v267, 32
  %v270 = vpop.permute.xlu0 %269
  %v272 = vadd.f32 %v262, %v270
  %v273 = vtanh.pop %v272
  %275 = vrot.lane.b32.xlu0 %v273, 64
  %v276 = vpop.permute.xlu0 %275
  %v278 = vmul.f32 %v260, %v276
  %s279 = scalar_lea.vmem [#allocation2], 24
  %v280 = vld [vmem:[%s279] sm:$0xff]
  %282 = vrot.lane.b32.xlu0 %v278, 32
  %v283 = vpop.permute.xlu0 %282
  %v284 = vsel %vm128, %v283, 0
  %286 = vmatpush.msra.mxu0 0.0
  %287 = vmatpush.msra.mxu0 0.0
  %288 = vmatpush.msra.mxu0 0.0
  %289 = vmatpush.msra.mxu0 0.0
  %290 = vmatpush.msra.mxu0 0.0
  %291 = vmatpush.msra.mxu0 0.0
  %292 = vmatpush.msra.mxu0 0.0
  %293 = vmatpush.msra.mxu0 0.0
  %294 = vmatpush.msra.mxu0 0.0
  %295 = vmatpush.msra.mxu0 0.0
  %296 = vmatpush.msra.mxu0 0.0
  %297 = vmatpush.msra.mxu0 0.0
  %298 = vmatpush.msra.mxu0 %v127
  %299 = vmatpush.msra.mxu0 %v126
  %300 = vmatpush.msra.mxu0 %v125
  %301 = vmatpush.msra.mxu0 %v124
  %302 = vmatmul.f32.gmra.mxu0 %v284
  %v303 = vpop.f32.mrf.mxu0
  %v304 = vadd.f32 0.0, %v303
  %305 = vdwg.mxu0
  %v306 = vadd.f32 %v280, %v304
  %v307 = vmul.f32 %v306, 0.5
  %v308 = vtanh.pop %v307
  %v309 = vmul.f32 %v308, 0.5
  %v310 = vadd.f32 %v309, 0.5
  %v311 = vtanh.pop %v306
  %v312 = vmul.f32 %v310, %v272
  %314 = vrot.lane.b32.xlu0 %v311, 64
  %v315 = vpop.permute.xlu0 %314
  %v317 = vmul.f32 %v310, %v315
  %319 = vrot.lane.b32.xlu0 %v317, 32
  %v320 = vpop.permute.xlu0 %319
  %v322 = vadd.f32 %v312, %v320
  %v323 = vtanh.pop %v322
  %325 = vrot.lane.b32.xlu0 %v323, 64
  %v326 = vpop.permute.xlu0 %325
  %v328 = vmul.f32 %v310, %v326
  %s329 = scalar_lea.vmem [#allocation2], 32
  %v330 = vld [vmem:[%s329] sm:$0xff]
  %332 = vrot.lane.b32.xlu0 %v328, 32
  %v333 = vpop.permute.xlu0 %332
  %v334 = vsel %vm128, %v333, 0
  %336 = vmatpush.msra.mxu0 0.0
  %337 = vmatpush.msra.mxu0 0.0
  %338 = vmatpush.msra.mxu0 0.0
  %339 = vmatpush.msra.mxu0 0.0
  %340 = vmatpush.msra.mxu0 0.0
  %341 = vmatpush.msra.mxu0 0.0
  %342 = vmatpush.msra.mxu0 0.0
  %343 = vmatpush.msra.mxu0 0.0
  %344 = vmatpush.msra.mxu0 0.0
  %345 = vmatpush.msra.mxu0 0.0
  %346 = vmatpush.msra.mxu0 0.0
  %347 = vmatpush.msra.mxu0 0.0
  %348 = vmatpush.msra.mxu0 %v127
  %349 = vmatpush.msra.mxu0 %v126
  %350 = vmatpush.msra.mxu0 %v125
  %351 = vmatpush.msra.mxu0 %v124
  %352 = vmatmul.f32.gmra.mxu0 %v334
  %v353 = vpop.f32.mrf.mxu0
  %v354 = vadd.f32 0.0, %v353
  %355 = vdwg.mxu0
  %v356 = vadd.f32 %v330, %v354
  %v357 = vmul.f32 %v356, 0.5
  %v358 = vtanh.pop %v357
  %v359 = vmul.f32 %v358, 0.5
  %v360 = vadd.f32 %v359, 0.5
  %v361 = vtanh.pop %v356
  %v362 = vmul.f32 %v360, %v322
  %364 = vrot.lane.b32.xlu0 %v361, 64
  %v365 = vpop.permute.xlu0 %364
  %v367 = vmul.f32 %v360, %v365
  %369 = vrot.lane.b32.xlu0 %v367, 32
  %v370 = vpop.permute.xlu0 %369
  %v372 = vadd.f32 %v362, %v370
  %v373 = vtanh.pop %v372
  %375 = vrot.lane.b32.xlu0 %v373, 64
  %v376 = vpop.permute.xlu0 %375
  %v378 = vmul.f32 %v360, %v376
  %s379 = scalar_lea.vmem [#allocation2], 40
  %v380 = vld [vmem:[%s379] sm:$0xff]
  %382 = vrot.lane.b32.xlu0 %v378, 32
  %v383 = vpop.permute.xlu0 %382
  %v384 = vsel %vm128, %v383, 0
  %386 = vmatpush.msra.mxu0 0.0
  %387 = vmatpush.msra.mxu0 0.0
  %388 = vmatpush.msra.mxu0 0.0
  %389 = vmatpush.msra.mxu0 0.0
  %390 = vmatpush.msra.mxu0 0.0
  %391 = vmatpush.msra.mxu0 0.0
  %392 = vmatpush.msra.mxu0 0.0
  %393 = vmatpush.msra.mxu0 0.0
  %394 = vmatpush.msra.mxu0 0.0
  %395 = vmatpush.msra.mxu0 0.0
  %396 = vmatpush.msra.mxu0 0.0
  %397 = vmatpush.msra.mxu0 0.0
  %398 = vmatpush.msra.mxu0 %v127
  %399 = vmatpush.msra.mxu0 %v126
  %400 = vmatpush.msra.mxu0 %v125
  %401 = vmatpush.msra.mxu0 %v124
  %402 = vmatmul.f32.gmra.mxu0 %v384
  %v403 = vpop.f32.mrf.mxu0
  %v404 = vadd.f32 0.0, %v403
  %405 = vdwg.mxu0
  %v406 = vadd.f32 %v380, %v404
  %v407 = vmul.f32 %v406, 0.5
  %v408 = vtanh.pop %v407
  %v409 = vmul.f32 %v408, 0.5
  %v410 = vadd.f32 %v409, 0.5
  %v411 = vtanh.pop %v406
  %v412 = vmul.f32 %v410, %v372
  %414 = vrot.lane.b32.xlu0 %v411, 64
  %v415 = vpop.permute.xlu0 %414
  %v417 = vmul.f32 %v410, %v415
  %419 = vrot.lane.b32.xlu0 %v417, 32
  %v420 = vpop.permute.xlu0 %419
  %v422 = vadd.f32 %v412, %v420
  %v423 = vtanh.pop %v422
  %425 = vrot.lane.b32.xlu0 %v423, 64
  %v426 = vpop.permute.xlu0 %425
  %v428 = vmul.f32 %v410, %v426
  %s429 = scalar_lea.vmem [#allocation2], 48
  %v430 = vld [vmem:[%s429] sm:$0xff]
  %432 = vrot.lane.b32.xlu0 %v428, 32
  %v433 = vpop.permute.xlu0 %432
  %v434 = vsel %vm128, %v433, 0
  %436 = vmatpush.msra.mxu0 0.0
  %437 = vmatpush.msra.mxu0 0.0
  %438 = vmatpush.msra.mxu0 0.0
  %439 = vmatpush.msra.mxu0 0.0
  %440 = vmatpush.msra.mxu0 0.0
  %441 = vmatpush.msra.mxu0 0.0
  %442 = vmatpush.msra.mxu0 0.0
  %443 = vmatpush.msra.mxu0 0.0
  %444 = vmatpush.msra.mxu0 0.0
  %445 = vmatpush.msra.mxu0 0.0
  %446 = vmatpush.msra.mxu0 0.0
  %447 = vmatpush.msra.mxu0 0.0
  %448 = vmatpush.msra.mxu0 %v127
  %449 = vmatpush.msra.mxu0 %v126
  %450 = vmatpush.msra.mxu0 %v125
  %451 = vmatpush.msra.mxu0 %v124
  %452 = vmatmul.f32.gmra.mxu0 %v434
  %v453 = vpop.f32.mrf.mxu0
  %v454 = vadd.f32 0.0, %v453
  %455 = vdwg.mxu0
  %v456 = vadd.f32 %v430, %v454
  %v457 = vmul.f32 %v456, 0.5
  %v458 = vtanh.pop %v457
  %v459 = vmul.f32 %v458, 0.5
  %v460 = vadd.f32 %v459, 0.5
  %v461 = vtanh.pop %v456
  %v462 = vmul.f32 %v460, %v422
  %464 = vrot.lane.b32.xlu0 %v461, 64
  %v465 = vpop.permute.xlu0 %464
  %v467 = vmul.f32 %v460, %v465
  %469 = vrot.lane.b32.xlu0 %v467, 32
  %v470 = vpop.permute.xlu0 %469
  %v472 = vadd.f32 %v462, %v470
  %v473 = vtanh.pop %v472
  %475 = vrot.lane.b32.xlu0 %v473, 64
  %v476 = vpop.permute.xlu0 %475
  %v478 = vmul.f32 %v460, %v476
  %s479 = scalar_lea.vmem [#allocation2], 56
  %v480 = vld [vmem:[%s479] sm:$0xff]
  %482 = vrot.lane.b32.xlu0 %v478, 32
  %v483 = vpop.permute.xlu0 %482
  %v484 = vsel %vm128, %v483, 0
  %486 = vmatpush.msra.mxu0 0.0
  %487 = vmatpush.msra.mxu0 0.0
  %488 = vmatpush.msra.mxu0 0.0
  %489 = vmatpush.msra.mxu0 0.0
  %490 = vmatpush.msra.mxu0 0.0
  %491 = vmatpush.msra.mxu0 0.0
  %492 = vmatpush.msra.mxu0 0.0
  %493 = vmatpush.msra.mxu0 0.0
  %494 = vmatpush.msra.mxu0 0.0
  %495 = vmatpush.msra.mxu0 0.0
  %496 = vmatpush.msra.mxu0 0.0
  %497 = vmatpush.msra.mxu0 0.0
  %498 = vmatpush.msra.mxu0 %v127
  %499 = vmatpush.msra.mxu0 %v126
  %500 = vmatpush.msra.mxu0 %v125
  %501 = vmatpush.msra.mxu0 %v124
  %502 = vmatmul.f32.gmra.mxu0 %v484
  %v503 = vpop.f32.mrf.mxu0
  %v504 = vadd.f32 0.0, %v503
  %505 = vdwg.mxu0
  %v506 = vadd.f32 %v480, %v504
  %v507 = vmul.f32 %v506, 0.5
  %v508 = vtanh.pop %v507
  %v509 = vmul.f32 %v508, 0.5
  %v510 = vadd.f32 %v509, 0.5
  %v511 = vtanh.pop %v506
  %v512 = vmul.f32 %v510, %v472
  %514 = vrot.lane.b32.xlu0 %v511, 64
  %v515 = vpop.permute.xlu0 %514
  %v517 = vmul.f32 %v510, %v515
  %519 = vrot.lane.b32.xlu0 %v517, 32
  %v520 = vpop.permute.xlu0 %519
  %v522 = vadd.f32 %v512, %v520
  %v523 = vtanh.pop %v522
  %525 = vrot.lane.b32.xlu0 %v523, 64
  %v526 = vpop.permute.xlu0 %525
  %v528 = vmul.f32 %v510, %v526
  %530 = vrot.lane.b32.xlu0 %v528, 32
  %v531 = vpop.permute.xlu0 %530
  %533 = vst.msk [vmem:[%s9] sm:$0xff] %vm128, %v531
  %535 = vrot.lane.b32.xlu0 %v522, 96
  %v536 = vpop.permute.xlu0 %535
  %538 = vst.msk [vmem:[%s10] sm:$0xff] %vm128, %v536
  %v539 = vld [vmem:[%s6] sm:$0xff]
  %v540 = vld [vmem:[%s6 + $0x8] sm:$0xff]
  %v541 = vld [vmem:[%s6 + $0x10] sm:$0xff]
  %v542 = vld [vmem:[%s6 + $0x18] sm:$0xff]
  %v543 = vld [vmem:[%s7] sm:$0x1]
  %v545 = vperm.slane %v543, 0
  %v547 = vsel %vm128, %v531, 0
  %549 = vmatpush.msra.mxu0 0.0
  %550 = vmatpush.msra.mxu0 0.0
  %551 = vmatpush.msra.mxu0 0.0
  %552 = vmatpush.msra.mxu0 0.0
  %553 = vmatpush.msra.mxu0 0.0
  %554 = vmatpush.msra.mxu0 0.0
  %555 = vmatpush.msra.mxu0 0.0
  %556 = vmatpush.msra.mxu0 0.0
  %557 = vmatpush.msra.mxu0 0.0
  %558 = vmatpush.msra.mxu0 0.0
  %559 = vmatpush.msra.mxu0 0.0
  %560 = vmatpush.msra.mxu0 0.0
  %561 = vmatpush.msra.mxu0 %v542
  %562 = vmatpush.msra.mxu0 %v541
  %563 = vmatpush.msra.mxu0 %v540
  %564 = vmatpush.msra.mxu0 %v539
  %565 = vmatmul.f32.gmra.mxu0 %v547
  %v566 = vpop.f32.mrf.mxu0
  %v567 = vadd.f32 %v545, %v566
  %568 = vdwg.mxu0
  %569 = vst [vmem:[%s8] sm:$0xff] %v567
  // Predicated region
  $region34: #{lstm_net_forward.1} parent=0 // pred_check
    _
  $region35: #{lstm_net_forward.1} parent=0 // pred_check_branch
    %571 = sbr.rel (0) target = $region37
  $region36: #{lstm_net_forward.1} parent=0 // pred_region
    _
  $region37: #{lstm_net_forward.1} parent=0 // pred_fallthru
    _
  // Predicated region
  $region38: #{lstm_net_forward.1} parent=0 // pred_check
    _
  $region39: #{lstm_net_forward.1} parent=0 // pred_check_branch
    %573 = sbr.rel (0) target = $region41
  $region40: #{lstm_net_forward.1} parent=0 // pred_region
    _
  $region41: #{lstm_net_forward.1} parent=0 // pred_fallthru
    _
  // Predicated region
  $region42: #{lstm_net_forward.1} parent=0 // pred_check
    _
  $region43: #{lstm_net_forward.1} parent=0 // pred_check_branch
    %575 = sbr.rel (0) target = $region45
  $region44: #{lstm_net_forward.1} parent=0 // pred_region
    _
  $region45: #{lstm_net_forward.1} parent=0 // pred_fallthru
    _
  // Predicated region
  $region46: #{lstm_net_forward.1} parent=0 // pred_check
    _
  $region47: #{lstm_net_forward.1} parent=0 // pred_check_branch
    %577 = sbr.rel (0) target = $region49
  $region48: #{lstm_net_forward.1} parent=0 // pred_region
    _
  $region49: #{lstm_net_forward.1} parent=0 // pred_fallthru
    _
  // Predicated region
  $region50: #{lstm_net_forward.1} parent=0 // pred_check
    _
  $region51: #{lstm_net_forward.1} parent=0 // pred_check_branch
    %579 = sbr.rel (0) target = $region53
  $region52: #{lstm_net_forward.1} parent=0 // pred_region
    _
  $region53: #{lstm_net_forward.1} parent=0 // pred_fallthru
    _
  // Predicated region
  $region54: #{lstm_net_forward.1} parent=0 // pred_check
    _
  $region55: #{lstm_net_forward.1} parent=0 // pred_check_branch
    %581 = sbr.rel (0) target = $region57
  $region56: #{lstm_net_forward.1} parent=0 // pred_region
    _
  $region57: #{lstm_net_forward.1} parent=0 // pred_fallthru
    _

</llo_original>
